<compile_context>
chip_gen: v6e
topology: v6e:2x2x1
jax: 0.10.0
libtpu: 0.0.40
codegen_flags: <defaults>
</compile_context>

<pallas_src>
import jax
import jax.numpy as jnp
from jax.experimental import pallas as pl
from jax.experimental.pallas import tpu as pltpu


# ---------------------------------------------------------------------------
# Recommended production path: zero-copy unsqueeze (no kernel, no HBM traffic).
# ---------------------------------------------------------------------------
def im2video(x, time_dim: int = 2):
    """JAX equivalent of Im2Video.forward — zero-copy (bitcast) fast path."""
    assert time_dim == 2, "written for time_dim=2 (NCHW -> NCTHW)"
    if x.ndim == 5:
        return x
    if x.ndim == 4:
        return jnp.expand_dims(x, axis=time_dim)
    raise ValueError(f"Dimension incorrect {x.shape}")


# ---------------------------------------------------------------------------
# Materializing copy: single HBM -> HBM DMA (no VMEM staging, no grid steps).
# ---------------------------------------------------------------------------
def _hbm_copy_kernel(x_hbm, o_hbm, sem):
    # One large DMA: streams the whole tensor HBM->HBM at copy roofline.
    cp = pltpu.make_async_copy(x_hbm, o_hbm, sem)
    cp.start()
    cp.wait()


def im2video_pallas(x, time_dim: int = 2):
    """Im2Video with an explicit (materializing) HBM->HBM DMA copy on the 4-D path.

    Only use this when a materialized copy is actually required; prefer
    `im2video()` (zero-copy) otherwise.
    """
    assert time_dim == 2, "written for time_dim=2 (NCHW -> NCTHW)"
    if x.ndim == 5:
        # Matches the PyTorch module: 5-D video passes through unchanged.
        return x
    if x.ndim != 4:
        raise ValueError(f"Dimension incorrect {x.shape}")

    B, C, H, W = x.shape
    M, N = B * C, H * W
    itemsize = jnp.dtype(x.dtype).itemsize
    total_bytes = M * N * itemsize

    # Free reshape to a 2-D slab; src/dst shapes must match for the DMA.
    # Lane density is irrelevant here: the copy never touches vregs or VMEM,
    # so dtype packing / (8,128) tiling / vmem_limit_bytes all drop out.
    x2d = jnp.reshape(x, (M, N))

    out2d = pl.pallas_call(
        _hbm_copy_kernel,
        out_shape=jax.ShapeDtypeStruct((M, N), x.dtype),
        in_specs=[pl.BlockSpec(memory_space=pl.ANY)],   # raw HBM ref
        out_specs=pl.BlockSpec(memory_space=pl.ANY),    # raw HBM ref
        scratch_shapes=[pltpu.SemaphoreType.DMA],       # DMA completion sem
        # Pure bandwidth op: read + write the whole tensor, zero compute.
        cost_estimate=pl.CostEstimate(
            flops=0, transcendentals=0, bytes_accessed=2 * total_bytes
        ),
    )(x2d)

    # Free reshape back, inserting the size-1 time axis.
    return jnp.reshape(out2d, (B, C, 1, H, W))


if __name__ == "__main__":
    key = jax.random.PRNGKey(0)

    # 4-D image input (B, C, H, W) -> (B, C, 1, H, W), f32.
    x4 = jax.random.normal(key, (2, 4, 16, 16), dtype=jnp.float32)
    ref4 = jnp.expand_dims(x4, axis=2)

    # Pallas materializing-copy path (HBM->HBM DMA).
    y4_pallas = jax.block_until_ready(im2video_pallas(x4))
    assert y4_pallas.shape == (2, 4, 1, 16, 16), y4_pallas.shape
    assert y4_pallas.dtype == x4.dtype
    assert bool(jnp.array_equal(y4_pallas, ref4))

    # Zero-copy recommended path.
    y4_fast = jax.block_until_ready(im2video(x4))
    assert y4_fast.shape == (2, 4, 1, 16, 16)
    assert bool(jnp.array_equal(y4_fast, ref4))

    # Non-f32 dtype (bf16): the DMA copy is dtype-agnostic.
    x4b = jax.random.normal(key, (2, 4, 16, 16), dtype=jnp.bfloat16)
    y4b = jax.block_until_ready(im2video_pallas(x4b))
    assert y4b.shape == (2, 4, 1, 16, 16)
    assert y4b.dtype == jnp.bfloat16
    assert bool(jnp.array_equal(y4b, jnp.expand_dims(x4b, axis=2)))

    # 5-D video input passes through unchanged (matches the PyTorch module).
    x5 = jax.random.normal(key, (2, 4, 3, 16, 16), dtype=jnp.float32)
    y5 = jax.block_until_ready(im2video_pallas(x5))
    assert y5.shape == x5.shape
    assert bool(jnp.array_equal(y5, x5))

    print("KERNEL_OK")
</pallas_src>

<mosaic_0001>
module attributes {stable_mosaic.version = 11 : i64} {
  func.func @_hbm_copy_kernel(%arg0: memref<8x256xf32, #tpu.memory_space<any>>, %arg1: memref<8x256xf32, #tpu.memory_space<any>>, %arg2: memref<!tpu.dma_semaphore, #tpu.memory_space<semaphore_mem>>) attributes {dimension_semantics = [], scalar_prefetch = 0 : i64, scratch_operands = 1 : i64, tpu.core_type = #tpu.core_type<tc>} {
    tpu.enqueue_dma source(%arg0 : memref<8x256xf32, #tpu.memory_space<any>>) target(%arg1 : memref<8x256xf32, #tpu.memory_space<any>>) target_semaphore(%arg2 : memref<!tpu.dma_semaphore, #tpu.memory_space<semaphore_mem>>)
    tpu.wait_dma2 semaphore(%arg2 : memref<!tpu.dma_semaphore, #tpu.memory_space<semaphore_mem>>) src(%arg0 : memref<8x256xf32, #tpu.memory_space<any>>) dst(%arg1 : memref<8x256xf32, #tpu.memory_space<any>>)
    return
  }
}

</mosaic_0001>

<llo_original>
// kernel: tpu_custom_call.1
$region0: #{tpu_custom_call.1}
  #allocation0 [shape = 'u32[]', space=smem, size = 0x4, offset = 0x4, fixed_abs, tag = 'smem constant byte address 0x4 - core index']
  #allocation1 [shape = 'u32[144,128]{1,0:T(1,128)}', space=vmem, size = 0x12000, scoped, tag = 'internal scratch']
  #allocation2 [shape = 's32[1]{0}', space=sflag, size = 0x4, scoped, tag = 'scratch operand']
  #allocation3 [shape = 's32[]', space=sflag, size = 0x4, offset = 0, fixed_abs, tag = 'sflag constant byte address 0x0 - dummy sync flag']
  #allocation4 [shape = 'u32[0]{0}', space=smem, size = 0, offset = 0, fixed_abs, tag = 'smem constant byte address 0x0 - null']
  %s0 = inlined_call_operand.hbm [shape: f32[8,256], index: 0, kind: input, shape index: {}]
  %s1 = inlined_call_operand.hbm [shape: f32[8,256], index: 1, kind: output, shape index: {}]
  %s2 = sld [smem:[#allocation0]]
  $region2: #{tpu_custom_call.1} parent=0
    _
  %s4 = ssub.s32 1, %s2
  %s5 = scalar_select 0, %s4, %s2
  %s7 = sshll.u32 1, 14
  %s8 = sxor.u32 4294967295, %s7
  %12 = dma.general %s0, 256, %s1, [#allocation2], 131072, [#allocation4], 0, 0
  %s13 = smul.u32 8, 1
  %s14 = smul.u32 %s13, 2
  %s15 = sshll.u32 %s14, 4
  %16 = dma.done [#allocation2], %s15
  %17 = vsyncmov [#allocation2]
  %s18 = vpop.sfrf %17
  %p19 = scmp.eq.s32.totalorder %s18, 0
  %p20 = pneg %p19
  %22 = shalt.err (%p20)

</llo_original>
